<compile_context>
chip_gen: v6e
topology: v6e:2x2x1
jax: 0.10.0
libtpu: 0.0.40
codegen_flags: <defaults>
</compile_context>

<pallas_src>
import functools

import jax
import jax.numpy as jnp
import numpy as np
from jax.experimental import pallas as pl
from jax.experimental.pallas import tpu as pltpu


def _round_up(x, m):
    return -(-x // m) * m


def _dag_encoder_kernel(h_ref, be_ref, wT_ref, b_ref, out_ref, acc_ref, *, tile_g):
    # h_ref:   (TN, Dn)      node-embedding tile
    # be_ref:  (TN, 1) int32 effective graph id per node (-1 = masked out / padding)
    # wT_ref:  (Dn, De_pad)  linear weight, transposed, zero-padded on De
    # b_ref:   (1, De_pad)   bias, zero-padded
    # out_ref: (TG, De_pad)
    # acc_ref: (TG, Dn)      running-max accumulator (VMEM scratch)
    gi = pl.program_id(0)          # graph-block index (parallel axis)
    k = pl.program_id(1)           # node-tile index   (reduction axis)
    nk = pl.num_programs(1)

    neg_inf = jnp.float32(-jnp.inf)

    @pl.when(k == 0)
    def _():
        acc_ref[...] = jnp.full(acc_ref.shape, neg_inf, dtype=acc_ref.dtype)

    h = h_ref[...]                 # (TN, Dn) f32
    be = be_ref[...]               # (TN, 1) int32

    # Running masked max per graph in this graph block (small static unroll,
    # everything stays 2-D -> flat vreg pressure regardless of N or G).
    for g_local in range(tile_g):
        g_global = gi * tile_g + g_local
        mask = be == g_global                               # (TN, 1)
        masked = jnp.where(mask, h, neg_inf)                # (TN, Dn)
        tile_max = jnp.max(masked, axis=0, keepdims=True)   # (1, Dn)
        row = acc_ref[pl.ds(g_local, 1), :]
        acc_ref[pl.ds(g_local, 1), :] = jnp.maximum(row, tile_max)

    @pl.when(k == nk - 1)
    def _():
        acc = acc_ref[...]                                  # (TG, Dn)
        # Emptiness is implicit in the -inf accumulator: zero-fill (PyG behavior).
        pooled = jnp.where(acc > neg_inf, acc, jnp.float32(0.0))
        out_ref[...] = (
            jnp.dot(pooled, wT_ref[...], preferred_element_type=jnp.float32)
            + b_ref[...]
        )


def dag_encoder_forward(h_node, stage_mask, batch, num_graphs, weight, bias,
                        *, tile_n=512, tile_g=8):
    """h_node: [N, Dn] f32; stage_mask: [N] bool; batch: [N] int; weight: [De, Dn];
       bias: [De].  Returns [num_graphs, De] f32."""
    N, Dn = h_node.shape
    De = weight.shape[0]
    G = int(num_graphs)

    # Tile sizes (clamped for small demo shapes; sublane-multiple of 8).
    TN = min(tile_n, _round_up(N, 8))
    TG = tile_g
    N_pad = _round_up(N, TN)
    G_pad = _round_up(G, TG)
    De_pad = _round_up(De, 128)            # lane-dense output store

    # Fold stage_mask into the graph-id vector: masked / padded nodes -> -1
    # (never matches a valid graph id).  This removes the (G, N) sel matrix.
    batch_eff = jnp.where(stage_mask, batch.astype(jnp.int32), jnp.int32(-1))
    batch_eff = jnp.pad(batch_eff, (0, N_pad - N), constant_values=-1)
    batch_eff = batch_eff.reshape(N_pad, 1)

    h_pad = jnp.pad(h_node.astype(jnp.float32), ((0, N_pad - N), (0, 0)))

    wT = jnp.pad(weight.astype(jnp.float32).T, ((0, 0), (0, De_pad - De)))  # (Dn, De_pad)
    b2 = jnp.pad(bias.astype(jnp.float32), (0, De_pad - De)).reshape(1, De_pad)

    grid = (G_pad // TG, N_pad // TN)

    kernel = functools.partial(_dag_encoder_kernel, tile_g=TG)

    out = pl.pallas_call(
        kernel,
        out_shape=jax.ShapeDtypeStruct((G_pad, De_pad), jnp.float32),
        grid_spec=pltpu.PrefetchScalarGridSpec(
            num_scalar_prefetch=0,
            grid=grid,
            in_specs=[
                pl.BlockSpec((TN, Dn), lambda gi, k: (k, 0)),        # node tile
                pl.BlockSpec((TN, 1), lambda gi, k: (k, 0)),         # graph ids
                pl.BlockSpec((Dn, De_pad), lambda gi, k: (0, 0)),    # W^T (resident)
                pl.BlockSpec((1, De_pad), lambda gi, k: (0, 0)),     # bias (resident)
            ],
            out_specs=pl.BlockSpec((TG, De_pad), lambda gi, k: (gi, 0)),
            scratch_shapes=[pltpu.VMEM((TG, Dn), jnp.float32)],
        ),
        compiler_params=pltpu.CompilerParams(
            dimension_semantics=("parallel", "arbitrary")),
    )(h_pad, batch_eff, wT, b2)

    return out[:G, :De]


def dag_encoder_reference(h_node, stage_mask, batch, num_graphs, weight, bias):
    G = int(num_graphs)
    sel = stage_mask[None, :] & (batch[None, :] == jnp.arange(G)[:, None])
    masked = jnp.where(sel[:, :, None], h_node[None, :, :], -jnp.inf)
    pooled = jnp.max(masked, axis=1)
    pooled = jnp.where(jnp.any(sel, axis=1, keepdims=True), pooled, 0.0)
    return pooled @ weight.T + bias[None, :]


if __name__ == "__main__":
    # Small synthetic shapes consistent with the module.
    num_nodes = 24
    dim_node_emb = 32
    dim_emb = 16
    num_graphs = 4

    key = jax.random.PRNGKey(0)
    k_h, k_mask, k_w, k_b = jax.random.split(key, 4)

    h_node = jax.random.normal(k_h, (num_nodes, dim_node_emb), dtype=jnp.float32)
    stage_mask = jax.random.bernoulli(k_mask, p=0.6, shape=(num_nodes,))
    # Force one graph (the last) to have no selected nodes -> exercises zero-fill.
    stage_mask = stage_mask.at[18:24].set(False)
    batch = jnp.repeat(jnp.arange(num_graphs, dtype=jnp.int32),
                       num_nodes // num_graphs)

    # nn.Linear(dim_node_emb, dim_emb) init: U(-k, k), k = 1/sqrt(fan_in)
    bound = 1.0 / np.sqrt(dim_node_emb)
    weight = jax.random.uniform(k_w, (dim_emb, dim_node_emb),
                                minval=-bound, maxval=bound, dtype=jnp.float32)
    bias = jax.random.uniform(k_b, (dim_emb,),
                              minval=-bound, maxval=bound, dtype=jnp.float32)

    out = dag_encoder_forward(h_node, stage_mask, batch, num_graphs, weight, bias)
    out = jax.block_until_ready(out)

    ref = dag_encoder_reference(h_node, stage_mask, batch, num_graphs, weight, bias)
    np.testing.assert_allclose(np.asarray(out), np.asarray(ref),
                               rtol=1e-5, atol=1e-5)

    print("KERNEL_OK")
</pallas_src>

<mosaic_0001>
module attributes {stable_mosaic.version = 11 : i64} {
  func.func @_dag_encoder_kernel(%arg0: i32, %arg1: i32, %arg2: memref<24x32xf32, #tpu.memory_space<vmem>>, %arg3: memref<24x1xi32, #tpu.memory_space<vmem>>, %arg4: memref<32x128xf32, #tpu.memory_space<vmem>>, %arg5: memref<1x128xf32, #tpu.memory_space<vmem>>, %arg6: memref<8x128xf32, #tpu.memory_space<vmem>>, %arg7: memref<8x32xf32, #tpu.memory_space<vmem>>) attributes {dimension_semantics = [#tpu.dimension_semantics<parallel>, #tpu.dimension_semantics<arbitrary>], iteration_bounds = array<i64: 1, 1>, scalar_prefetch = 0 : i64, scratch_operands = 1 : i64, tpu.core_type = #tpu.core_type<tc>, window_params = [{transform_indices = @transform_0, window_bounds = array<i64: 24, 32>}, {transform_indices = @transform_1, window_bounds = array<i64: 24, 1>}, {pipeline_mode = #tpu.pipeline_mode<synchronous>, transform_indices = @transform_2, window_bounds = array<i64: 32, 128>}, {pipeline_mode = #tpu.pipeline_mode<synchronous>, transform_indices = @transform_3, window_bounds = array<i64: 1, 128>}, {transform_indices = @transform_4, window_bounds = array<i64: 8, 128>}]} {
    %c0_i32 = arith.constant 0 : i32
    %0 = arith.cmpi eq, %arg1, %c0_i32 : i32
    %1 = arith.extui %0 : i1 to i32
    %cst = arith.constant 0xFF800000 : f32
    %c0_i32_0 = arith.constant 0 : i32
    %2 = arith.cmpi ne, %1, %c0_i32_0 : i32
    scf.if %2 {
      %112 = vector.broadcast %cst : f32 to vector<8x32xf32>
      %c0_56 = arith.constant 0 : index
      %c0_57 = arith.constant 0 : index
      %113 = vector.load %arg7[%c0_56, %c0_57] : memref<8x32xf32, #tpu.memory_space<vmem>>, vector<8x32xf32>
      tpu.vector_store %arg7[%c0_56, %c0_57], %112 {strides = array<i32>} : memref<8x32xf32, #tpu.memory_space<vmem>>, vector<8x32xf32>,
    } else {
    }
    %c0 = arith.constant 0 : index
    %c0_1 = arith.constant 0 : index
    %3 = vector.load %arg2[%c0, %c0_1] : memref<24x32xf32, #tpu.memory_space<vmem>>, vector<24x32xf32>
    %c0_2 = arith.constant 0 : index
    %c0_3 = arith.constant 0 : index
    %4 = vector.load %arg3[%c0_2, %c0_3] : memref<24x1xi32, #tpu.memory_space<vmem>>, vector<24x1xi32>
    %c8_i32 = arith.constant 8 : i32
    %5 = arith.muli %arg0, %c8_i32 : i32
    %c0_i32_4 = arith.constant 0 : i32
    %6 = arith.addi %5, %c0_i32_4 : i32
    %7 = vector.broadcast %6 : i32 to vector<24x1xi32>
    %8 = arith.cmpi eq, %4, %7 : vector<24x1xi32>
    %cst_5 = arith.constant 0xFF800000 : f32
    %9 = vector.shape_cast %8 : vector<24x1xi1> to vector<24x1xi1>
    %10 = vector.broadcast %9 : vector<24x1xi1> to vector<24x32xi1>
    %11 = vector.broadcast %cst_5 : f32 to vector<24x32xf32>
    %12 = arith.select %10, %3, %11 : vector<24x32xi1>, vector<24x32xf32>
    %cst_6 = arith.constant dense<0xFF800000> : vector<32xf32>
    %13 = vector.multi_reduction <maximumf>, %12, %cst_6 [0] : vector<24x32xf32> to vector<32xf32>
    %14 = vector.shape_cast %13 : vector<32xf32> to vector<1x32xf32>
    %c0_7 = arith.constant 0 : index
    %c0_8 = arith.constant 0 : index
    %15 = vector.load %arg7[%c0_7, %c0_8] : memref<8x32xf32, #tpu.memory_space<vmem>>, vector<1x32xf32>
    %16 = arith.maximumf %15, %14 : vector<1x32xf32>
    %c0_9 = arith.constant 0 : index
    %c0_10 = arith.constant 0 : index
    %17 = vector.load %arg7[%c0_9, %c0_10] : memref<8x32xf32, #tpu.memory_space<vmem>>, vector<1x32xf32>
    tpu.vector_store %arg7[%c0_9, %c0_10], %16 {strides = array<i32>} : memref<8x32xf32, #tpu.memory_space<vmem>>, vector<1x32xf32>,
    %c8_i32_11 = arith.constant 8 : i32
    %18 = arith.muli %arg0, %c8_i32_11 : i32
    %c1_i32 = arith.constant 1 : i32
    %19 = arith.addi %18, %c1_i32 : i32
    %20 = vector.broadcast %19 : i32 to vector<24x1xi32>
    %21 = arith.cmpi eq, %4, %20 : vector<24x1xi32>
    %cst_12 = arith.constant 0xFF800000 : f32
    %22 = vector.shape_cast %21 : vector<24x1xi1> to vector<24x1xi1>
    %23 = vector.broadcast %22 : vector<24x1xi1> to vector<24x32xi1>
    %24 = vector.broadcast %cst_12 : f32 to vector<24x32xf32>
    %25 = arith.select %23, %3, %24 : vector<24x32xi1>, vector<24x32xf32>
    %cst_13 = arith.constant dense<0xFF800000> : vector<32xf32>
    %26 = vector.multi_reduction <maximumf>, %25, %cst_13 [0] : vector<24x32xf32> to vector<32xf32>
    %27 = vector.shape_cast %26 : vector<32xf32> to vector<1x32xf32>
    %c1 = arith.constant 1 : index
    %c0_14 = arith.constant 0 : index
    %28 = vector.load %arg7[%c1, %c0_14] : memref<8x32xf32, #tpu.memory_space<vmem>>, vector<1x32xf32>
    %29 = arith.maximumf %28, %27 : vector<1x32xf32>
    %c1_15 = arith.constant 1 : index
    %c0_16 = arith.constant 0 : index
    %30 = vector.load %arg7[%c1_15, %c0_16] : memref<8x32xf32, #tpu.memory_space<vmem>>, vector<1x32xf32>
    tpu.vector_store %arg7[%c1_15, %c0_16], %29 {strides = array<i32>} : memref<8x32xf32, #tpu.memory_space<vmem>>, vector<1x32xf32>,
    %c8_i32_17 = arith.constant 8 : i32
    %31 = arith.muli %arg0, %c8_i32_17 : i32
    %c2_i32 = arith.constant 2 : i32
    %32 = arith.addi %31, %c2_i32 : i32
    %33 = vector.broadcast %32 : i32 to vector<24x1xi32>
    %34 = arith.cmpi eq, %4, %33 : vector<24x1xi32>
    %cst_18 = arith.constant 0xFF800000 : f32
    %35 = vector.shape_cast %34 : vector<24x1xi1> to vector<24x1xi1>
    %36 = vector.broadcast %35 : vector<24x1xi1> to vector<24x32xi1>
    %37 = vector.broadcast %cst_18 : f32 to vector<24x32xf32>
    %38 = arith.select %36, %3, %37 : vector<24x32xi1>, vector<24x32xf32>
    %cst_19 = arith.constant dense<0xFF800000> : vector<32xf32>
    %39 = vector.multi_reduction <maximumf>, %38, %cst_19 [0] : vector<24x32xf32> to vector<32xf32>
    %40 = vector.shape_cast %39 : vector<32xf32> to vector<1x32xf32>
    %c2 = arith.constant 2 : index
    %c0_20 = arith.constant 0 : index
    %41 = vector.load %arg7[%c2, %c0_20] : memref<8x32xf32, #tpu.memory_space<vmem>>, vector<1x32xf32>
    %42 = arith.maximumf %41, %40 : vector<1x32xf32>
    %c2_21 = arith.constant 2 : index
    %c0_22 = arith.constant 0 : index
    %43 = vector.load %arg7[%c2_21, %c0_22] : memref<8x32xf32, #tpu.memory_space<vmem>>, vector<1x32xf32>
    tpu.vector_store %arg7[%c2_21, %c0_22], %42 {strides = array<i32>} : memref<8x32xf32, #tpu.memory_space<vmem>>, vector<1x32xf32>,
    %c8_i32_23 = arith.constant 8 : i32
    %44 = arith.muli %arg0, %c8_i32_23 : i32
    %c3_i32 = arith.constant 3 : i32
    %45 = arith.addi %44, %c3_i32 : i32
    %46 = vector.broadcast %45 : i32 to vector<24x1xi32>
    %47 = arith.cmpi eq, %4, %46 : vector<24x1xi32>
    %cst_24 = arith.constant 0xFF800000 : f32
    %48 = vector.shape_cast %47 : vector<24x1xi1> to vector<24x1xi1>
    %49 = vector.broadcast %48 : vector<24x1xi1> to vector<24x32xi1>
    %50 = vector.broadcast %cst_24 : f32 to vector<24x32xf32>
    %51 = arith.select %49, %3, %50 : vector<24x32xi1>, vector<24x32xf32>
    %cst_25 = arith.constant dense<0xFF800000> : vector<32xf32>
    %52 = vector.multi_reduction <maximumf>, %51, %cst_25 [0] : vector<24x32xf32> to vector<32xf32>
    %53 = vector.shape_cast %52 : vector<32xf32> to vector<1x32xf32>
    %c3 = arith.constant 3 : index
    %c0_26 = arith.constant 0 : index
    %54 = vector.load %arg7[%c3, %c0_26] : memref<8x32xf32, #tpu.memory_space<vmem>>, vector<1x32xf32>
    %55 = arith.maximumf %54, %53 : vector<1x32xf32>
    %c3_27 = arith.constant 3 : index
    %c0_28 = arith.constant 0 : index
    %56 = vector.load %arg7[%c3_27, %c0_28] : memref<8x32xf32, #tpu.memory_space<vmem>>, vector<1x32xf32>
    tpu.vector_store %arg7[%c3_27, %c0_28], %55 {strides = array<i32>} : memref<8x32xf32, #tpu.memory_space<vmem>>, vector<1x32xf32>,
    %c8_i32_29 = arith.constant 8 : i32
    %57 = arith.muli %arg0, %c8_i32_29 : i32
    %c4_i32 = arith.constant 4 : i32
    %58 = arith.addi %57, %c4_i32 : i32
    %59 = vector.broadcast %58 : i32 to vector<24x1xi32>
    %60 = arith.cmpi eq, %4, %59 : vector<24x1xi32>
    %cst_30 = arith.constant 0xFF800000 : f32
    %61 = vector.shape_cast %60 : vector<24x1xi1> to vector<24x1xi1>
    %62 = vector.broadcast %61 : vector<24x1xi1> to vector<24x32xi1>
    %63 = vector.broadcast %cst_30 : f32 to vector<24x32xf32>
    %64 = arith.select %62, %3, %63 : vector<24x32xi1>, vector<24x32xf32>
    %cst_31 = arith.constant dense<0xFF800000> : vector<32xf32>
    %65 = vector.multi_reduction <maximumf>, %64, %cst_31 [0] : vector<24x32xf32> to vector<32xf32>
    %66 = vector.shape_cast %65 : vector<32xf32> to vector<1x32xf32>
    %c4 = arith.constant 4 : index
    %c0_32 = arith.constant 0 : index
    %67 = vector.load %arg7[%c4, %c0_32] : memref<8x32xf32, #tpu.memory_space<vmem>>, vector<1x32xf32>
    %68 = arith.maximumf %67, %66 : vector<1x32xf32>
    %c4_33 = arith.constant 4 : index
    %c0_34 = arith.constant 0 : index
    %69 = vector.load %arg7[%c4_33, %c0_34] : memref<8x32xf32, #tpu.memory_space<vmem>>, vector<1x32xf32>
    tpu.vector_store %arg7[%c4_33, %c0_34], %68 {strides = array<i32>} : memref<8x32xf32, #tpu.memory_space<vmem>>, vector<1x32xf32>,
    %c8_i32_35 = arith.constant 8 : i32
    %70 = arith.muli %arg0, %c8_i32_35 : i32
    %c5_i32 = arith.constant 5 : i32
    %71 = arith.addi %70, %c5_i32 : i32
    %72 = vector.broadcast %71 : i32 to vector<24x1xi32>
    %73 = arith.cmpi eq, %4, %72 : vector<24x1xi32>
    %cst_36 = arith.constant 0xFF800000 : f32
    %74 = vector.shape_cast %73 : vector<24x1xi1> to vector<24x1xi1>
    %75 = vector.broadcast %74 : vector<24x1xi1> to vector<24x32xi1>
    %76 = vector.broadcast %cst_36 : f32 to vector<24x32xf32>
    %77 = arith.select %75, %3, %76 : vector<24x32xi1>, vector<24x32xf32>
    %cst_37 = arith.constant dense<0xFF800000> : vector<32xf32>
    %78 = vector.multi_reduction <maximumf>, %77, %cst_37 [0] : vector<24x32xf32> to vector<32xf32>
    %79 = vector.shape_cast %78 : vector<32xf32> to vector<1x32xf32>
    %c5 = arith.constant 5 : index
    %c0_38 = arith.constant 0 : index
    %80 = vector.load %arg7[%c5, %c0_38] : memref<8x32xf32, #tpu.memory_space<vmem>>, vector<1x32xf32>
    %81 = arith.maximumf %80, %79 : vector<1x32xf32>
    %c5_39 = arith.constant 5 : index
    %c0_40 = arith.constant 0 : index
    %82 = vector.load %arg7[%c5_39, %c0_40] : memref<8x32xf32, #tpu.memory_space<vmem>>, vector<1x32xf32>
    tpu.vector_store %arg7[%c5_39, %c0_40], %81 {strides = array<i32>} : memref<8x32xf32, #tpu.memory_space<vmem>>, vector<1x32xf32>,
    %c8_i32_41 = arith.constant 8 : i32
    %83 = arith.muli %arg0, %c8_i32_41 : i32
    %c6_i32 = arith.constant 6 : i32
    %84 = arith.addi %83, %c6_i32 : i32
    %85 = vector.broadcast %84 : i32 to vector<24x1xi32>
    %86 = arith.cmpi eq, %4, %85 : vector<24x1xi32>
    %cst_42 = arith.constant 0xFF800000 : f32
    %87 = vector.shape_cast %86 : vector<24x1xi1> to vector<24x1xi1>
    %88 = vector.broadcast %87 : vector<24x1xi1> to vector<24x32xi1>
    %89 = vector.broadcast %cst_42 : f32 to vector<24x32xf32>
    %90 = arith.select %88, %3, %89 : vector<24x32xi1>, vector<24x32xf32>
    %cst_43 = arith.constant dense<0xFF800000> : vector<32xf32>
    %91 = vector.multi_reduction <maximumf>, %90, %cst_43 [0] : vector<24x32xf32> to vector<32xf32>
    %92 = vector.shape_cast %91 : vector<32xf32> to vector<1x32xf32>
    %c6 = arith.constant 6 : index
    %c0_44 = arith.constant 0 : index
    %93 = vector.load %arg7[%c6, %c0_44] : memref<8x32xf32, #tpu.memory_space<vmem>>, vector<1x32xf32>
    %94 = arith.maximumf %93, %92 : vector<1x32xf32>
    %c6_45 = arith.constant 6 : index
    %c0_46 = arith.constant 0 : index
    %95 = vector.load %arg7[%c6_45, %c0_46] : memref<8x32xf32, #tpu.memory_space<vmem>>, vector<1x32xf32>
    tpu.vector_store %arg7[%c6_45, %c0_46], %94 {strides = array<i32>} : memref<8x32xf32, #tpu.memory_space<vmem>>, vector<1x32xf32>,
    %c8_i32_47 = arith.constant 8 : i32
    %96 = arith.muli %arg0, %c8_i32_47 : i32
    %c7_i32 = arith.constant 7 : i32
    %97 = arith.addi %96, %c7_i32 : i32
    %98 = vector.broadcast %97 : i32 to vector<24x1xi32>
    %99 = arith.cmpi eq, %4, %98 : vector<24x1xi32>
    %cst_48 = arith.constant 0xFF800000 : f32
    %100 = vector.shape_cast %99 : vector<24x1xi1> to vector<24x1xi1>
    %101 = vector.broadcast %100 : vector<24x1xi1> to vector<24x32xi1>
    %102 = vector.broadcast %cst_48 : f32 to vector<24x32xf32>
    %103 = arith.select %101, %3, %102 : vector<24x32xi1>, vector<24x32xf32>
    %cst_49 = arith.constant dense<0xFF800000> : vector<32xf32>
    %104 = vector.multi_reduction <maximumf>, %103, %cst_49 [0] : vector<24x32xf32> to vector<32xf32>
    %105 = vector.shape_cast %104 : vector<32xf32> to vector<1x32xf32>
    %c7 = arith.constant 7 : index
    %c0_50 = arith.constant 0 : index
    %106 = vector.load %arg7[%c7, %c0_50] : memref<8x32xf32, #tpu.memory_space<vmem>>, vector<1x32xf32>
    %107 = arith.maximumf %106, %105 : vector<1x32xf32>
    %c7_51 = arith.constant 7 : index
    %c0_52 = arith.constant 0 : index
    %108 = vector.load %arg7[%c7_51, %c0_52] : memref<8x32xf32, #tpu.memory_space<vmem>>, vector<1x32xf32>
    tpu.vector_store %arg7[%c7_51, %c0_52], %107 {strides = array<i32>} : memref<8x32xf32, #tpu.memory_space<vmem>>, vector<1x32xf32>,
    %c0_i32_53 = arith.constant 0 : i32
    %109 = arith.cmpi eq, %arg1, %c0_i32_53 : i32
    %110 = arith.extui %109 : i1 to i32
    %cst_54 = arith.constant 0xFF800000 : f32
    %c0_i32_55 = arith.constant 0 : i32
    %111 = arith.cmpi ne, %110, %c0_i32_55 : i32
    scf.if %111 {
      %c0_56 = arith.constant 0 : index
      %c0_57 = arith.constant 0 : index
      %112 = vector.load %arg7[%c0_56, %c0_57] : memref<8x32xf32, #tpu.memory_space<vmem>>, vector<8x32xf32>
      %113 = vector.broadcast %cst_54 : f32 to vector<8x32xf32>
      %114 = arith.cmpf ogt, %112, %113 : vector<8x32xf32>
      %cst_58 = arith.constant 0.000000e+00 : f32
      %115 = vector.broadcast %cst_58 : f32 to vector<8x32xf32>
      %116 = arith.select %114, %112, %115 : vector<8x32xi1>, vector<8x32xf32>
      %c0_59 = arith.constant 0 : index
      %c0_60 = arith.constant 0 : index
      %117 = vector.load %arg4[%c0_59, %c0_60] : memref<32x128xf32, #tpu.memory_space<vmem>>, vector<32x128xf32>
      %cst_61 = arith.constant dense<0.000000e+00> : vector<8x128xf32>
      %118 = tpu.matmul %116, %117, %cst_61 {dimension_numbers = #tpu.dot_dimension_numbers<[1], [0], [0], [1], [0, 0, 1, 1], [], []>} : vector<8x32xf32>, vector<32x128xf32>, vector<8x128xf32> -> vector<8x128xf32>
      %c0_62 = arith.constant 0 : index
      %c0_63 = arith.constant 0 : index
      %119 = vector.load %arg5[%c0_62, %c0_63] : memref<1x128xf32, #tpu.memory_space<vmem>>, vector<1x128xf32>
      %120 = vector.broadcast %119 : vector<1x128xf32> to vector<8x128xf32>
      %121 = arith.addf %118, %120 : vector<8x128xf32>
      %c0_64 = arith.constant 0 : index
      %c0_65 = arith.constant 0 : index
      %122 = vector.load %arg6[%c0_64, %c0_65] : memref<8x128xf32, #tpu.memory_space<vmem>>, vector<8x128xf32>
      tpu.vector_store %arg6[%c0_64, %c0_65], %121 {strides = array<i32>} : memref<8x128xf32, #tpu.memory_space<vmem>>, vector<8x128xf32>,
    } else {
    }
    return
  }
  func.func @transform_0(%arg0: i32, %arg1: i32) -> (i32, i32) {
    %c0_i32 = arith.constant 0 : i32
    %c0_i32_0 = arith.constant 0 : i32
    return %arg1, %c0_i32 : i32, i32
  }
  func.func @transform_1(%arg0: i32, %arg1: i32) -> (i32, i32) {
    %c0_i32 = arith.constant 0 : i32
    %c0_i32_0 = arith.constant 0 : i32
    return %arg1, %c0_i32 : i32, i32
  }
  func.func @transform_2(%arg0: i32, %arg1: i32) -> (i32, i32) {
    %c0_i32 = arith.constant 0 : i32
    %c0_i32_0 = arith.constant 0 : i32
    %c0_i32_1 = arith.constant 0 : i32
    return %c0_i32, %c0_i32_0 : i32, i32
  }
  func.func @transform_3(%arg0: i32, %arg1: i32) -> (i32, i32) {
    %c0_i32 = arith.constant 0 : i32
    %c0_i32_0 = arith.constant 0 : i32
    %c0_i32_1 = arith.constant 0 : i32
    return %c0_i32, %c0_i32_0 : i32, i32
  }
  func.func @transform_4(%arg0: i32, %arg1: i32) -> (i32, i32) {
    %c0_i32 = arith.constant 0 : i32
    %c0_i32_0 = arith.constant 0 : i32
    return %arg0, %c0_i32 : i32, i32
  }
}

</mosaic_0001>

<llo_original>
// kernel: tpu_custom_call.1
$region0: #{tpu_custom_call.1}
  #allocation0 [shape = 'u32[]', space=smem, size = 0x4, offset = 0x4, fixed_abs, tag = 'smem constant byte address 0x4 - core index']
  #allocation1 [shape = 'u32[144,128]{1,0:T(1,128)}', space=vmem, size = 0x12000, scoped, tag = 'internal scratch']
  #allocation2 [shape = 'f32[8,32]{1,0:T(8,128)}', space=vmem, size = 0x1000, scoped, tag = 'scratch operand']
  %s0 = inlined_call_operand.vmem [shape: f32[24,32], index: 0, kind: input, shape index: {}]
  %s1 = inlined_call_operand.vmem [shape: s32[24,1], index: 1, kind: input, shape index: {}]
  %s2 = inlined_call_operand.hbm [shape: f32[32,128], index: 2, kind: input, shape index: {}]
  %s3 = inlined_call_operand.vmem [shape: f32[1,128], index: 3, kind: input, shape index: {}]
  %s4 = inlined_call_operand.hbm [shape: f32[8,128], index: 4, kind: output, shape index: {}]
  %s5 = sld [smem:[#allocation0]]
  $region38: #{tpu_custom_call.1} parent=0
    _
  %s7 = ssub.s32 1, %s5
  %s8 = scalar_select 0, %s7, %s5
  $region1: #{tpu_custom_call.1} parent=0
    #allocation3 [shape = 'u8[16384]{0}', space=vmem, size = 0x4000, scoped, tag = 'input window, operand 2, single buffered']
    #allocation4 [shape = 's32[1]{0}', space=sflag, size = 0x4, scoped, tag = 'scoped memory for tpu_custom_call.1']
    #allocation5 [shape = 's32[1]{0}', space=sflag, size = 0x4, scoped, tag = 'scoped memory for tpu_custom_call.1']
    #allocation6 [shape = 'u8[4096]{0}', space=vmem, size = 0x1000, scoped, tag = 'output window, operand 0, single buffered']
    %9 = vsyncpa [#allocation4], 0
    %10 = vsyncpa [#allocation5], 0
    // Predicated region
    $region2: #{tpu_custom_call.1} parent=1 // pred_check
      _
    $region3: #{tpu_custom_call.1} parent=1 // pred_check_branch
      %12 = sbr.rel (0) target = $region5
    $region4: #{tpu_custom_call.1} parent=1 // pred_region
      _
    $region5: #{tpu_custom_call.1} parent=1 // pred_fallthru
      _
    // Predicated region
    $region6: #{tpu_custom_call.1} parent=1 // pred_check
      _
    $region7: #{tpu_custom_call.1} parent=1 // pred_check_branch
      %14 = sbr.rel (0) target = $region9
    $region8: #{tpu_custom_call.1} parent=1 // pred_region
      _
    $region9: #{tpu_custom_call.1} parent=1 // pred_fallthru
      _
    // Predicated region
    $region10: #{tpu_custom_call.1} parent=1 // pred_check
      _
    $region11: #{tpu_custom_call.1} parent=1 // pred_check_branch
      %16 = sbr.rel (0) target = $region13
    $region12: #{tpu_custom_call.1} parent=1 // pred_region
      %s18 = ssub.s32 512, 512
      %19 = vsyncadd [#allocation4], %s18
      %s20 = sshll.u32 [#allocation3], 4
      %s21 = int_to_ptr.vmem [resolvable:$true] %s20
      %26 = dma.hbm_to_vmem [thread:$0]  %s2, 512, %s21, [#allocation4], 128, 128, 8
    $region13: #{tpu_custom_call.1} parent=1 // pred_fallthru
      _
    // Predicated region
    $region14: #{tpu_custom_call.1} parent=1 // pred_check
      _
    $region15: #{tpu_custom_call.1} parent=1 // pred_check_branch
      %28 = sbr.rel (0) target = $region17
    $region16: #{tpu_custom_call.1} parent=1 // pred_region
      _
    $region17: #{tpu_custom_call.1} parent=1 // pred_fallthru
      _
    // Predicated region
    $region18: #{tpu_custom_call.1} parent=1 // pred_check
      _
    $region19: #{tpu_custom_call.1} parent=1 // pred_check_branch
      %30 = sbr.rel (0) target = $region21
    $region20: #{tpu_custom_call.1} parent=1 // pred_region
      %31 = dma.done [#allocation4], 512
    $region21: #{tpu_custom_call.1} parent=1 // pred_fallthru
      _
    %p32 = scmp.eq.s32.totalorder 0, 0
    // Predicated region
    $region22: #{tpu_custom_call.1} parent=1 // pred_check
      %p33 = pneg %p32
    $region23: #{tpu_custom_call.1} parent=1 // pred_check_branch
      %35 = sbr.rel (%p33) target = $region25
    $region24: #{tpu_custom_call.1} parent=1 // pred_region
      %vm36 = vcmask 261120
      %37 = vst.msk [vmem:[#allocation2] sm:$0xff] %vm36, -inf
    $region25: #{tpu_custom_call.1} parent=1 // pred_fallthru
      _
    %v38 = vld [vmem:[%s0] sm:$0xff]
    %v39 = vld [vmem:[%s0 + $0x8] sm:$0xff]
    %v40 = vld [vmem:[%s0 + $0x10] sm:$0xff]
    %v41 = vld [vmem:[%s1] sm:$0xff]
    %v42 = vld [vmem:[%s1 + $0x8] sm:$0xff]
    %v43 = vld [vmem:[%s1 + $0x10] sm:$0xff]
    %s44 = smul.u32 0, 8
    %v45 = vstv %s44
    %vm46 = vcmp.eq.s32.totalorder %v41, %v45
    %vm47 = vcmp.eq.s32.totalorder %v42, %v45
    %vm48 = vcmp.eq.s32.totalorder %v43, %v45
    %v49 = vsel %vm46, 1, 0
    %v50 = vsel %vm47, 1, 0
    %v51 = vsel %vm48, 1, 0
    %52 = vset.pattern.permute.xlu0 0
    %53 = vperm.xlu0 %52, %v49
    %v54 = vpop.permute.xlu0 %53
    %55 = vset.pattern.permute.xlu0 0
    %56 = vperm.xlu0 %55, %v50
    %v57 = vpop.permute.xlu0 %56
    %58 = vset.pattern.permute.xlu0 0
    %59 = vperm.xlu0 %58, %v51
    %v60 = vpop.permute.xlu0 %59
    %vm61 = vcmp.eq.s32.totalorder %v54, 1
    %vm62 = vcmp.eq.s32.totalorder %v57, 1
    %vm63 = vcmp.eq.s32.totalorder %v60, 1
    %v64 = vsel %vm61, %v38, -inf
    %v65 = vsel %vm62, %v39, -inf
    %v66 = vsel %vm63, %v40, -inf
    %vm67 = vcmask 261120
    %v68 = vsel %vm67, %v64, -inf
    %v69 = vsel %vm67, %v65, -inf
    %v70 = vsel %vm67, %v66, -inf
    %v71 = vmax.f32 %v68, %v69
    %v72 = vmax.f32 %v71, %v70
    %v73 = vrot.slane %v72, 4
    %v74 = vmax.f32 %v72, %v73
    %v75 = vrot.slane %v74, 2
    %v76 = vmax.f32 %v74, %v75
    %v77 = vrot.slane %v76, 1
    %v78 = vmax.f32 %v76, %v77
    %v79 = vld [vmem:[#allocation2] sm:$0x1]
    %v80 = vmax.f32 %v79, %v78
    %vm81 = vcmask 253952
    %82 = vst.msk [vmem:[#allocation2] sm:$0x1] %vm81, %v80
    %s83 = sadd.s32 %s44, 1
    %v84 = vstv %s83
    %vm85 = vcmp.eq.s32.totalorder %v41, %v84
    %vm86 = vcmp.eq.s32.totalorder %v42, %v84
    %vm87 = vcmp.eq.s32.totalorder %v43, %v84
    %v88 = vsel %vm85, 1, 0
    %v89 = vsel %vm86, 1, 0
    %v90 = vsel %vm87, 1, 0
    %91 = vset.pattern.permute.xlu0 0
    %92 = vperm.xlu0 %91, %v88
    %v93 = vpop.permute.xlu0 %92
    %94 = vset.pattern.permute.xlu0 0
    %95 = vperm.xlu0 %94, %v89
    %v96 = vpop.permute.xlu0 %95
    %97 = vset.pattern.permute.xlu0 0
    %98 = vperm.xlu0 %97, %v90
    %v99 = vpop.permute.xlu0 %98
    %vm100 = vcmp.eq.s32.totalorder %v93, 1
    %vm101 = vcmp.eq.s32.totalorder %v96, 1
    %vm102 = vcmp.eq.s32.totalorder %v99, 1
    %v103 = vsel %vm100, %v38, -inf
    %v104 = vsel %vm101, %v39, -inf
    %v105 = vsel %vm102, %v40, -inf
    %v106 = vsel %vm67, %v103, -inf
    %v107 = vsel %vm67, %v104, -inf
    %v108 = vsel %vm67, %v105, -inf
    %v109 = vmax.f32 %v106, %v107
    %v110 = vmax.f32 %v109, %v108
    %v111 = vrot.slane %v110, 4
    %v112 = vmax.f32 %v110, %v111
    %v113 = vrot.slane %v112, 2
    %v114 = vmax.f32 %v112, %v113
    %v115 = vrot.slane %v114, 1
    %v116 = vmax.f32 %v114, %v115
    %v117 = vld [vmem:[#allocation2 + $0x1] sm:$0x1]
    %v118 = vmax.f32 %v117, %v116
    %119 = vst.msk [vmem:[#allocation2 + $0x1] sm:$0x1] %vm81, %v118
    %s120 = sadd.s32 %s44, 2
    %v121 = vstv %s120
    %vm122 = vcmp.eq.s32.totalorder %v41, %v121
    %vm123 = vcmp.eq.s32.totalorder %v42, %v121
    %vm124 = vcmp.eq.s32.totalorder %v43, %v121
    %v125 = vsel %vm122, 1, 0
    %v126 = vsel %vm123, 1, 0
    %v127 = vsel %vm124, 1, 0
    %128 = vset.pattern.permute.xlu0 0
    %129 = vperm.xlu0 %128, %v125
    %v130 = vpop.permute.xlu0 %129
    %131 = vset.pattern.permute.xlu0 0
    %132 = vperm.xlu0 %131, %v126
    %v133 = vpop.permute.xlu0 %132
    %134 = vset.pattern.permute.xlu0 0
    %135 = vperm.xlu0 %134, %v127
    %v136 = vpop.permute.xlu0 %135
    %vm137 = vcmp.eq.s32.totalorder %v130, 1
    %vm138 = vcmp.eq.s32.totalorder %v133, 1
    %vm139 = vcmp.eq.s32.totalorder %v136, 1
    %v140 = vsel %vm137, %v38, -inf
    %v141 = vsel %vm138, %v39, -inf
    %v142 = vsel %vm139, %v40, -inf
    %v143 = vsel %vm67, %v140, -inf
    %v144 = vsel %vm67, %v141, -inf
    %v145 = vsel %vm67, %v142, -inf
    %v146 = vmax.f32 %v143, %v144
    %v147 = vmax.f32 %v146, %v145
    %v148 = vrot.slane %v147, 4
    %v149 = vmax.f32 %v147, %v148
    %v150 = vrot.slane %v149, 2
    %v151 = vmax.f32 %v149, %v150
    %v152 = vrot.slane %v151, 1
    %v153 = vmax.f32 %v151, %v152
    %v154 = vld [vmem:[#allocation2 + $0x2] sm:$0x1]
    %v155 = vmax.f32 %v154, %v153
    %156 = vst.msk [vmem:[#allocation2 + $0x2] sm:$0x1] %vm81, %v155
    %s157 = sadd.s32 %s44, 3
    %v158 = vstv %s157
    %vm159 = vcmp.eq.s32.totalorder %v41, %v158
    %vm160 = vcmp.eq.s32.totalorder %v42, %v158
    %vm161 = vcmp.eq.s32.totalorder %v43, %v158
    %v162 = vsel %vm159, 1, 0
    %v163 = vsel %vm160, 1, 0
    %v164 = vsel %vm161, 1, 0
    %165 = vset.pattern.permute.xlu0 0
    %166 = vperm.xlu0 %165, %v162
    %v167 = vpop.permute.xlu0 %166
    %168 = vset.pattern.permute.xlu0 0
    %169 = vperm.xlu0 %168, %v163
    %v170 = vpop.permute.xlu0 %169
    %171 = vset.pattern.permute.xlu0 0
    %172 = vperm.xlu0 %171, %v164
    %v173 = vpop.permute.xlu0 %172
    %vm174 = vcmp.eq.s32.totalorder %v167, 1
    %vm175 = vcmp.eq.s32.totalorder %v170, 1
    %vm176 = vcmp.eq.s32.totalorder %v173, 1
    %v177 = vsel %vm174, %v38, -inf
    %v178 = vsel %vm175, %v39, -inf
    %v179 = vsel %vm176, %v40, -inf
    %v180 = vsel %vm67, %v177, -inf
    %v181 = vsel %vm67, %v178, -inf
    %v182 = vsel %vm67, %v179, -inf
    %v183 = vmax.f32 %v180, %v181
    %v184 = vmax.f32 %v183, %v182
    %v185 = vrot.slane %v184, 4
    %v186 = vmax.f32 %v184, %v185
    %v187 = vrot.slane %v186, 2
    %v188 = vmax.f32 %v186, %v187
    %v189 = vrot.slane %v188, 1
    %v190 = vmax.f32 %v188, %v189
    %v191 = vld [vmem:[#allocation2 + $0x3] sm:$0x1]
    %v192 = vmax.f32 %v191, %v190
    %193 = vst.msk [vmem:[#allocation2 + $0x3] sm:$0x1] %vm81, %v192
    %s194 = sadd.s32 %s44, 4
    %v195 = vstv %s194
    %vm196 = vcmp.eq.s32.totalorder %v41, %v195
    %vm197 = vcmp.eq.s32.totalorder %v42, %v195
    %vm198 = vcmp.eq.s32.totalorder %v43, %v195
    %v199 = vsel %vm196, 1, 0
    %v200 = vsel %vm197, 1, 0
    %v201 = vsel %vm198, 1, 0
    %202 = vset.pattern.permute.xlu0 0
    %203 = vperm.xlu0 %202, %v199
    %v204 = vpop.permute.xlu0 %203
    %205 = vset.pattern.permute.xlu0 0
    %206 = vperm.xlu0 %205, %v200
    %v207 = vpop.permute.xlu0 %206
    %208 = vset.pattern.permute.xlu0 0
    %209 = vperm.xlu0 %208, %v201
    %v210 = vpop.permute.xlu0 %209
    %vm211 = vcmp.eq.s32.totalorder %v204, 1
    %vm212 = vcmp.eq.s32.totalorder %v207, 1
    %vm213 = vcmp.eq.s32.totalorder %v210, 1
    %v214 = vsel %vm211, %v38, -inf
    %v215 = vsel %vm212, %v39, -inf
    %v216 = vsel %vm213, %v40, -inf
    %v217 = vsel %vm67, %v214, -inf
    %v218 = vsel %vm67, %v215, -inf
    %v219 = vsel %vm67, %v216, -inf
    %v220 = vmax.f32 %v217, %v218
    %v221 = vmax.f32 %v220, %v219
    %v222 = vrot.slane %v221, 4
    %v223 = vmax.f32 %v221, %v222
    %v224 = vrot.slane %v223, 2
    %v225 = vmax.f32 %v223, %v224
    %v226 = vrot.slane %v225, 1
    %v227 = vmax.f32 %v225, %v226
    %v228 = vld [vmem:[#allocation2 + $0x4] sm:$0x1]
    %v229 = vmax.f32 %v228, %v227
    %230 = vst.msk [vmem:[#allocation2 + $0x4] sm:$0x1] %vm81, %v229
    %s231 = sadd.s32 %s44, 5
    %v232 = vstv %s231
    %vm233 = vcmp.eq.s32.totalorder %v41, %v232
    %vm234 = vcmp.eq.s32.totalorder %v42, %v232
    %vm235 = vcmp.eq.s32.totalorder %v43, %v232
    %v236 = vsel %vm233, 1, 0
    %v237 = vsel %vm234, 1, 0
    %v238 = vsel %vm235, 1, 0
    %239 = vset.pattern.permute.xlu0 0
    %240 = vperm.xlu0 %239, %v236
    %v241 = vpop.permute.xlu0 %240
    %242 = vset.pattern.permute.xlu0 0
    %243 = vperm.xlu0 %242, %v237
    %v244 = vpop.permute.xlu0 %243
    %245 = vset.pattern.permute.xlu0 0
    %246 = vperm.xlu0 %245, %v238
    %v247 = vpop.permute.xlu0 %246
    %vm248 = vcmp.eq.s32.totalorder %v241, 1
    %vm249 = vcmp.eq.s32.totalorder %v244, 1
    %vm250 = vcmp.eq.s32.totalorder %v247, 1
    %v251 = vsel %vm248, %v38, -inf
    %v252 = vsel %vm249, %v39, -inf
    %v253 = vsel %vm250, %v40, -inf
    %v254 = vsel %vm67, %v251, -inf
    %v255 = vsel %vm67, %v252, -inf
    %v256 = vsel %vm67, %v253, -inf
    %v257 = vmax.f32 %v254, %v255
    %v258 = vmax.f32 %v257, %v256
    %v259 = vrot.slane %v258, 4
    %v260 = vmax.f32 %v258, %v259
    %v261 = vrot.slane %v260, 2
    %v262 = vmax.f32 %v260, %v261
    %v263 = vrot.slane %v262, 1
    %v264 = vmax.f32 %v262, %v263
    %v265 = vld [vmem:[#allocation2 + $0x5] sm:$0x1]
    %v266 = vmax.f32 %v265, %v264
    %267 = vst.msk [vmem:[#allocation2 + $0x5] sm:$0x1] %vm81, %v266
    %s268 = sadd.s32 %s44, 6
    %v269 = vstv %s268
    %vm270 = vcmp.eq.s32.totalorder %v41, %v269
    %vm271 = vcmp.eq.s32.totalorder %v42, %v269
    %vm272 = vcmp.eq.s32.totalorder %v43, %v269
    %v273 = vsel %vm270, 1, 0
    %v274 = vsel %vm271, 1, 0
    %v275 = vsel %vm272, 1, 0
    %276 = vset.pattern.permute.xlu0 0
    %277 = vperm.xlu0 %276, %v273
    %v278 = vpop.permute.xlu0 %277
    %279 = vset.pattern.permute.xlu0 0
    %280 = vperm.xlu0 %279, %v274
    %v281 = vpop.permute.xlu0 %280
    %282 = vset.pattern.permute.xlu0 0
    %283 = vperm.xlu0 %282, %v275
    %v284 = vpop.permute.xlu0 %283
    %vm285 = vcmp.eq.s32.totalorder %v278, 1
    %vm286 = vcmp.eq.s32.totalorder %v281, 1
    %vm287 = vcmp.eq.s32.totalorder %v284, 1
    %v288 = vsel %vm285, %v38, -inf
    %v289 = vsel %vm286, %v39, -inf
    %v290 = vsel %vm287, %v40, -inf
    %v291 = vsel %vm67, %v288, -inf
    %v292 = vsel %vm67, %v289, -inf
    %v293 = vsel %vm67, %v290, -inf
    %v294 = vmax.f32 %v291, %v292
    %v295 = vmax.f32 %v294, %v293
    %v296 = vrot.slane %v295, 4
    %v297 = vmax.f32 %v295, %v296
    %v298 = vrot.slane %v297, 2
    %v299 = vmax.f32 %v297, %v298
    %v300 = vrot.slane %v299, 1
    %v301 = vmax.f32 %v299, %v300
    %v302 = vld [vmem:[#allocation2 + $0x6] sm:$0x1]
    %v303 = vmax.f32 %v302, %v301
    %304 = vst.msk [vmem:[#allocation2 + $0x6] sm:$0x1] %vm81, %v303
    %s305 = sadd.s32 %s44, 7
    %v306 = vstv %s305
    %vm307 = vcmp.eq.s32.totalorder %v41, %v306
    %vm308 = vcmp.eq.s32.totalorder %v42, %v306
    %vm309 = vcmp.eq.s32.totalorder %v43, %v306
    %v310 = vsel %vm307, 1, 0
    %v311 = vsel %vm308, 1, 0
    %v312 = vsel %vm309, 1, 0
    %313 = vset.pattern.permute.xlu0 0
    %314 = vperm.xlu0 %313, %v310
    %v315 = vpop.permute.xlu0 %314
    %316 = vset.pattern.permute.xlu0 0
    %317 = vperm.xlu0 %316, %v311
    %v318 = vpop.permute.xlu0 %317
    %319 = vset.pattern.permute.xlu0 0
    %320 = vperm.xlu0 %319, %v312
    %v321 = vpop.permute.xlu0 %320
    %vm322 = vcmp.eq.s32.totalorder %v315, 1
    %vm323 = vcmp.eq.s32.totalorder %v318, 1
    %vm324 = vcmp.eq.s32.totalorder %v321, 1
    %v325 = vsel %vm322, %v38, -inf
    %v326 = vsel %vm323, %v39, -inf
    %v327 = vsel %vm324, %v40, -inf
    %v328 = vsel %vm67, %v325, -inf
    %v329 = vsel %vm67, %v326, -inf
    %v330 = vsel %vm67, %v327, -inf
    %v331 = vmax.f32 %v328, %v329
    %v332 = vmax.f32 %v331, %v330
    %v333 = vrot.slane %v332, 4
    %v334 = vmax.f32 %v332, %v333
    %v335 = vrot.slane %v334, 2
    %v336 = vmax.f32 %v334, %v335
    %v337 = vrot.slane %v336, 1
    %v338 = vmax.f32 %v336, %v337
    %v339 = vld [vmem:[#allocation2 + $0x7] sm:$0x1]
    %v340 = vmax.f32 %v339, %v338
    %341 = vst.msk [vmem:[#allocation2 + $0x7] sm:$0x1] %vm81, %v340
    // Predicated region
    $region26: #{tpu_custom_call.1} parent=1 // pred_check
      %p342 = pneg %p32
    $region27: #{tpu_custom_call.1} parent=1 // pred_check_branch
      %344 = sbr.rel (%p342) target = $region29
    $region28: #{tpu_custom_call.1} parent=1 // pred_region
      %v345 = vld [vmem:[#allocation2] sm:$0xff]
      %vm346 = vcmp.gt.f32.partialorder %v345, -inf
      %v347 = vsel %vm346, %v345, 0.0
      %v348 = vld [vmem:[#allocation3] sm:$0xff]
      %v349 = vld [vmem:[#allocation3 + $0x8] sm:$0xff]
      %v350 = vld [vmem:[#allocation3 + $0x10] sm:$0xff]
      %v351 = vld [vmem:[#allocation3 + $0x18] sm:$0xff]
      %v352 = vld [vmem:[%s3] sm:$0x1]
      %v354 = vlaneseq
      %v355 = vshrl.u32 %v354, 7
      %v356 = vsub.s32 0, %v355
      %v357 = vrot.slane %v352, %v356
      %v360 = vsel %vm67, %v347, 0
      %362 = vmatprep.subr.mxu0 0.0
      %363 = vmatpush1.msra.mxu0 0.0
      %364 = vmatprep.subr.mxu0 0.0
      %365 = vmatpush1.msra.mxu0 0.0
      %366 = vmatprep.subr.mxu0 0.0
      %367 = vmatpush1.msra.mxu0 0.0
      %368 = vmatprep.subr.mxu0 0.0
      %369 = vmatpush1.msra.mxu0 0.0
      %370 = vmatprep.subr.mxu0 0.0
      %371 = vmatpush1.msra.mxu0 0.0
      %372 = vmatprep.subr.mxu0 0.0
      %373 = vmatpush1.msra.mxu0 0.0
      %374 = vmatprep.subr.mxu0 0.0
      %375 = vmatpush1.msra.mxu0 0.0
      %376 = vmatprep.subr.mxu0 0.0
      %377 = vmatpush1.msra.mxu0 0.0
      %378 = vmatprep.subr.mxu0 0.0
      %379 = vmatpush1.msra.mxu0 0.0
      %380 = vmatprep.subr.mxu0 0.0
      %381 = vmatpush1.msra.mxu0 0.0
      %382 = vmatprep.subr.mxu0 0.0
      %383 = vmatpush1.msra.mxu0 0.0
      %384 = vmatprep.subr.mxu0 0.0
      %385 = vmatpush1.msra.mxu0 0.0
      %386 = vmatprep.subr.mxu0 0.0
      %387 = vmatpush1.msra.mxu0 %v351
      %388 = vmatprep.subr.mxu0 0.0
      %389 = vmatpush1.msra.mxu0 %v350
      %390 = vmatprep.subr.mxu0 0.0
      %391 = vmatpush1.msra.mxu0 %v349
      %392 = vmatprep.subr.mxu0 0.0
      %393 = vmatpush1.msra.mxu0 %v348
      %394 = vmatprep.subr.mxu0 0.0
      %395 = vmatpush2.msra.mxu0 0.0
      %396 = vmatprep.subr.mxu0 0.0
      %397 = vmatpush2.msra.mxu0 0.0
      %398 = vmatprep.subr.mxu0 0.0
      %399 = vmatpush2.msra.mxu0 0.0
      %400 = vmatprep.subr.mxu0 0.0
      %401 = vmatpush2.msra.mxu0 0.0
      %402 = vmatprep.subr.mxu0 0.0
      %403 = vmatpush2.msra.mxu0 0.0
      %404 = vmatprep.subr.mxu0 0.0
      %405 = vmatpush2.msra.mxu0 0.0
      %406 = vmatprep.subr.mxu0 0.0
      %407 = vmatpush2.msra.mxu0 0.0
      %408 = vmatprep.subr.mxu0 0.0
      %409 = vmatpush2.msra.mxu0 0.0
      %410 = vmatprep.subr.mxu0 0.0
      %411 = vmatpush2.msra.mxu0 0.0
      %412 = vmatprep.subr.mxu0 0.0
      %413 = vmatpush2.msra.mxu0 0.0
      %414 = vmatprep.subr.mxu0 0.0
      %415 = vmatpush2.msra.mxu0 0.0
      %416 = vmatprep.subr.mxu0 0.0
      %417 = vmatpush2.msra.mxu0 0.0
      %418 = vmatprep.subr.mxu0 0.0
      %419 = vmatpush2.msra.mxu0 0.0
      %420 = vmatprep.subr.mxu0 0.0
      %421 = vmatpush2.msra.mxu0 0.0
      %422 = vmatprep.subr.mxu0 0.0
      %423 = vmatpush2.msra.mxu0 0.0
      %424 = vmatprep.subr.mxu0 0.0
      %425 = vmatpush2.msra.mxu0 0.0
      %426 = vmatprep.mubr.f32.mxu0 0.0
      %427 = vmatmul.mubr.f32.gmra.mxu0 %v360
      %v428 = vpop.f32.mrf.mxu0
      %v429 = vadd.f32 %v357, %v428
      %v430 = vpop.f32.mrf.mxu0
      %431 = vdwg.mxu0
      %432 = vst [vmem:[#allocation6] sm:$0xff] %v429
    $region29: #{tpu_custom_call.1} parent=1 // pred_fallthru
      _
    // Predicated region
    $region30: #{tpu_custom_call.1} parent=1 // pred_check
      _
    $region31: #{tpu_custom_call.1} parent=1 // pred_check_branch
      %434 = sbr.rel (0) target = $region33
    $region32: #{tpu_custom_call.1} parent=1 // pred_region
      %s436 = ssub.s32 128, 128
      %437 = vsyncadd [#allocation5], %s436
      %s439 = sshll.u32 [#allocation6], 4
      %s440 = int_to_ptr.vmem [resolvable:$true] %s439
      %442 = dma.vmem_to_hbm [thread:$0]  %s440, 128, %s4, [#allocation5]
    $region33: #{tpu_custom_call.1} parent=1 // pred_fallthru
      _
    // Predicated region
    $region34: #{tpu_custom_call.1} parent=1 // pred_check
      _
    $region35: #{tpu_custom_call.1} parent=1 // pred_check_branch
      %444 = sbr.rel (0) target = $region37
    $region36: #{tpu_custom_call.1} parent=1 // pred_region
      %445 = dma.done [#allocation5], 128
    $region37: #{tpu_custom_call.1} parent=1 // pred_fallthru
      _
    %446 = vsyncpa [#allocation4], 1
    %447 = vsyncpa [#allocation5], 1

</llo_original>
